<compile_context>
chip_gen: v6e
topology: v6e:2x2x1
jax: 0.10.0
libtpu: 0.0.40
codegen_flags: <defaults>
</compile_context>

<pallas_src>
import jax
import jax.numpy as jnp
from jax.experimental import pallas as pl
from jax.experimental.pallas import tpu as pltpu

_LANE = 128
_TM_CAP = 1024  # per-tile activations ~3 MB at tm=1024: << 16/32/64 MiB VMEM


def _round_up(n, m):
    return ((n + m - 1) // m) * m


def _mlp_kernel(x_ref,
                w1_ref, b1_ref,
                w2_ref, b2_ref,
                w3_ref, b3_ref,
                w4_ref, b4_ref,
                o_ref):
    # All matmuls hit the MXU with bf16 operands / f32 accumulation.
    # Bias-add runs in f32 (v5e VPU has no bf16); ReLU is fused with the
    # bf16 downcast that feeds the next matmul.  Everything stays in VMEM.
    x = x_ref[...].astype(jnp.bfloat16)

    h1 = jnp.dot(x, w1_ref[...], preferred_element_type=jnp.float32) + b1_ref[...]
    h1 = jnp.maximum(h1, 0.0).astype(jnp.bfloat16)

    h2 = jnp.dot(h1, w2_ref[...], preferred_element_type=jnp.float32) + b2_ref[...]
    h2 = jnp.maximum(h2, 0.0).astype(jnp.bfloat16)

    h3 = jnp.dot(h2, w3_ref[...], preferred_element_type=jnp.float32) + b3_ref[...]
    h3 = jnp.maximum(h3, 0.0).astype(jnp.bfloat16)

    h4 = jnp.dot(h3, w4_ref[...], preferred_element_type=jnp.float32) + b4_ref[...]
    o_ref[...] = h4.astype(o_ref.dtype)  # lane-dense bf16 store (halved writeback)


def prep_params(params):
    """One-time prep: zero-pad narrow dims to lane width (128), cast W to bf16.

    Padded weight rows/cols and bias entries are zero, so padded activations
    are exactly 0 through ReLU and contribute nothing downstream.  Call this
    ONCE (at init / after a weight update), not per forward call.
    """
    prepped = []
    prev_out_pad = None
    for (w, b) in params:
        fan_in, fan_out = w.shape
        in_pad = fan_in if prev_out_pad is None else prev_out_pad
        out_pad = max(_round_up(fan_out, _LANE), fan_out)
        wp = jnp.zeros((in_pad, out_pad), jnp.float32).at[:fan_in, :fan_out].set(w)
        bp = jnp.zeros((1, out_pad), jnp.float32).at[:, :fan_out].set(b)
        prepped.append((wp.astype(jnp.bfloat16), bp))  # weights bf16, biases f32
        prev_out_pad = out_pad
    return prepped


def _pick_tm(b_rounded):
    """Batch tile: multiple of 8 sublanes, capped at _TM_CAP.

    If the whole (rounded) batch fits in one tile, split it into two grid
    steps so both v7x TensorCores get work (harmless on v5e/v6e).  Large
    batches get big tiles so per-step work dwarfs the ~0.35us step overhead.
    """
    if b_rounded <= 8:
        return 8
    half = _round_up((b_rounded + 1) // 2, 8)
    return min(half, _TM_CAP)


def neural_net_forward(x, prepped, *, out_size):
    """x: (B, input_size) f32.  prepped: output of prep_params (bf16/padded)."""
    B, in_size = x.shape
    (w1, b1), (w2, b2), (w3, b3), (w4, b4) = prepped
    h1_n, h2_n, h3_n, out_pad = w1.shape[1], w2.shape[1], w3.shape[1], w4.shape[1]

    b8 = _round_up(B, 8)
    tm = _pick_tm(b8)
    b_pad = _round_up(b8, tm)
    if b_pad != B:
        x = jnp.zeros((b_pad, in_size), x.dtype).at[:B].set(x)

    grid = (b_pad // tm,)

    # Weights/biases: full-extent blocks, index_map pinned to block 0 so they
    # are DMA'd once and stay VMEM-resident (~250 KB) across batch tiles.
    resident = lambda a: pl.BlockSpec(a.shape, lambda i, _nd=a.ndim: (0,) * _nd)

    flops = 2 * b_pad * (in_size * h1_n + h1_n * h2_n + h2_n * h3_n + h3_n * out_pad)
    bytes_accessed = (b_pad * in_size * 4 + b_pad * out_pad * 2
                      + sum(int(w.size) * 2 + int(b.size) * 4 for w, b in prepped))

    out_padded = pl.pallas_call(
        _mlp_kernel,
        out_shape=jax.ShapeDtypeStruct((b_pad, out_pad), jnp.bfloat16),
        grid=grid,
        in_specs=[pl.BlockSpec((tm, in_size), lambda i: (i, 0)),
                  resident(w1), resident(b1),
                  resident(w2), resident(b2),
                  resident(w3), resident(b3),
                  resident(w4), resident(b4)],
        out_specs=pl.BlockSpec((tm, out_pad), lambda i: (i, 0)),
        compiler_params=pltpu.CompilerParams(
            dimension_semantics=("parallel",)),
        cost_estimate=pl.CostEstimate(
            flops=flops, transcendentals=0, bytes_accessed=bytes_accessed),
    )(x, w1, b1, w2, b2, w3, b3, w4, b4)

    # Slice off padded lanes / padded batch rows; return f32 like the module.
    return out_padded[:B, :out_size].astype(jnp.float32)


def init_params(key, input_size, output_size):
    """Deterministic init matching nn.Linear's U(-1/sqrt(fan_in), 1/sqrt(fan_in))."""
    dims = [(input_size, 256), (256, 256), (256, 16), (16, output_size)]
    params = []
    for (fan_in, fan_out) in dims:
        key, kw, kb = jax.random.split(key, 3)
        bound = 1.0 / jnp.sqrt(fan_in)
        w = jax.random.uniform(kw, (fan_in, fan_out), jnp.float32, -bound, bound)
        b = jax.random.uniform(kb, (1, fan_out), jnp.float32, -bound, bound)
        params.append((w, b))
    return params


def reference_forward(x, params):
    """Pure-f32 reference (matches the PyTorch module semantics)."""
    h = x
    for i, (w, b) in enumerate(params):
        h = h @ w + b
        if i < len(params) - 1:
            h = jnp.maximum(h, 0.0)
    return h


def reference_forward_bf16(x, params):
    """Reference using the kernel's dtype strategy (bf16 operands, f32 accum,
    final result rounded to bf16 like the kernel's output store)."""
    h = x
    for i, (w, b) in enumerate(params):
        h = jnp.dot(h.astype(jnp.bfloat16), w.astype(jnp.bfloat16),
                    preferred_element_type=jnp.float32) + b
        if i < len(params) - 1:
            h = jnp.maximum(h, 0.0)
    return h.astype(jnp.bfloat16).astype(jnp.float32)


if __name__ == "__main__":
    key = jax.random.PRNGKey(0)
    key, kx = jax.random.split(key)

    batch, input_size, output_size = 8, 32, 8
    x = jax.random.normal(kx, (batch, input_size), jnp.float32)
    params = init_params(key, input_size, output_size)

    # Parameter prep is done once, outside the per-call path.
    prepped = prep_params(params)
    forward = jax.jit(neural_net_forward, static_argnames=("out_size",))

    out = forward(x, prepped, out_size=output_size)
    out = jax.block_until_ready(out)

    assert out.shape == (batch, output_size)
    # Check against a JAX reference using the same bf16/f32 mix (incl. final
    # bf16 output rounding); tolerance covers reduction-order / 1-ulp effects.
    ref_bf16 = reference_forward_bf16(x, params)
    assert jnp.allclose(out, ref_bf16, atol=1e-2, rtol=1e-2)
    # Sanity check against the full-f32 PyTorch-equivalent forward.
    ref_f32 = reference_forward(x, params)
    assert jnp.allclose(out, ref_f32, atol=5e-2, rtol=5e-2)

    print("KERNEL_OK")
</pallas_src>

<mosaic_0001>
module attributes {stable_mosaic.version = 11 : i64} {
  func.func @_mlp_kernel(%arg0: i32, %arg1: memref<8x32xf32, #tpu.memory_space<vmem>>, %arg2: memref<32x256xbf16, #tpu.memory_space<vmem>>, %arg3: memref<1x256xf32, #tpu.memory_space<vmem>>, %arg4: memref<256x256xbf16, #tpu.memory_space<vmem>>, %arg5: memref<1x256xf32, #tpu.memory_space<vmem>>, %arg6: memref<256x128xbf16, #tpu.memory_space<vmem>>, %arg7: memref<1x128xf32, #tpu.memory_space<vmem>>, %arg8: memref<128x128xbf16, #tpu.memory_space<vmem>>, %arg9: memref<1x128xf32, #tpu.memory_space<vmem>>, %arg10: memref<8x128xbf16, #tpu.memory_space<vmem>>) attributes {dimension_semantics = [#tpu.dimension_semantics<parallel>], iteration_bounds = array<i64: 1>, scalar_prefetch = 0 : i64, scratch_operands = 0 : i64, tpu.core_type = #tpu.core_type<tc>, window_params = [{transform_indices = @transform_0, window_bounds = array<i64: 8, 32>}, {pipeline_mode = #tpu.pipeline_mode<synchronous>, transform_indices = @transform_1, window_bounds = array<i64: 32, 256>}, {pipeline_mode = #tpu.pipeline_mode<synchronous>, transform_indices = @transform_2, window_bounds = array<i64: 1, 256>}, {pipeline_mode = #tpu.pipeline_mode<synchronous>, transform_indices = @transform_3, window_bounds = array<i64: 256, 256>}, {pipeline_mode = #tpu.pipeline_mode<synchronous>, transform_indices = @transform_4, window_bounds = array<i64: 1, 256>}, {pipeline_mode = #tpu.pipeline_mode<synchronous>, transform_indices = @transform_5, window_bounds = array<i64: 256, 128>}, {pipeline_mode = #tpu.pipeline_mode<synchronous>, transform_indices = @transform_6, window_bounds = array<i64: 1, 128>}, {pipeline_mode = #tpu.pipeline_mode<synchronous>, transform_indices = @transform_7, window_bounds = array<i64: 128, 128>}, {pipeline_mode = #tpu.pipeline_mode<synchronous>, transform_indices = @transform_8, window_bounds = array<i64: 1, 128>}, {transform_indices = @transform_9, window_bounds = array<i64: 8, 128>}]} {
    %c0 = arith.constant 0 : index
    %c0_0 = arith.constant 0 : index
    %0 = vector.load %arg1[%c0, %c0_0] : memref<8x32xf32, #tpu.memory_space<vmem>>, vector<8x32xf32>
    %1 = arith.truncf %0 : vector<8x32xf32> to vector<8x32xbf16>
    %c0_1 = arith.constant 0 : index
    %c0_2 = arith.constant 0 : index
    %2 = vector.load %arg2[%c0_1, %c0_2] : memref<32x256xbf16, #tpu.memory_space<vmem>>, vector<32x256xbf16>
    %cst = arith.constant dense<0.000000e+00> : vector<8x256xf32>
    %3 = tpu.matmul %1, %2, %cst {dimension_numbers = #tpu.dot_dimension_numbers<[1], [0], [0], [1], [0, 0, 1, 1], [], []>} : vector<8x32xbf16>, vector<32x256xbf16>, vector<8x256xf32> -> vector<8x256xf32>
    %c0_3 = arith.constant 0 : index
    %c0_4 = arith.constant 0 : index
    %4 = vector.load %arg3[%c0_3, %c0_4] : memref<1x256xf32, #tpu.memory_space<vmem>>, vector<1x256xf32>
    %5 = vector.broadcast %4 : vector<1x256xf32> to vector<8x256xf32>
    %6 = arith.addf %3, %5 : vector<8x256xf32>
    %cst_5 = arith.constant 0.000000e+00 : f32
    %7 = vector.broadcast %cst_5 : f32 to vector<8x256xf32>
    %8 = arith.maximumf %6, %7 : vector<8x256xf32>
    %9 = arith.truncf %8 : vector<8x256xf32> to vector<8x256xbf16>
    %c0_6 = arith.constant 0 : index
    %c0_7 = arith.constant 0 : index
    %10 = vector.load %arg4[%c0_6, %c0_7] : memref<256x256xbf16, #tpu.memory_space<vmem>>, vector<256x256xbf16>
    %cst_8 = arith.constant dense<0.000000e+00> : vector<8x256xf32>
    %11 = tpu.matmul %9, %10, %cst_8 {dimension_numbers = #tpu.dot_dimension_numbers<[1], [0], [0], [1], [0, 0, 1, 1], [], []>} : vector<8x256xbf16>, vector<256x256xbf16>, vector<8x256xf32> -> vector<8x256xf32>
    %c0_9 = arith.constant 0 : index
    %c0_10 = arith.constant 0 : index
    %12 = vector.load %arg5[%c0_9, %c0_10] : memref<1x256xf32, #tpu.memory_space<vmem>>, vector<1x256xf32>
    %13 = vector.broadcast %12 : vector<1x256xf32> to vector<8x256xf32>
    %14 = arith.addf %11, %13 : vector<8x256xf32>
    %cst_11 = arith.constant 0.000000e+00 : f32
    %15 = vector.broadcast %cst_11 : f32 to vector<8x256xf32>
    %16 = arith.maximumf %14, %15 : vector<8x256xf32>
    %17 = arith.truncf %16 : vector<8x256xf32> to vector<8x256xbf16>
    %c0_12 = arith.constant 0 : index
    %c0_13 = arith.constant 0 : index
    %18 = vector.load %arg6[%c0_12, %c0_13] : memref<256x128xbf16, #tpu.memory_space<vmem>>, vector<256x128xbf16>
    %cst_14 = arith.constant dense<0.000000e+00> : vector<8x128xf32>
    %19 = tpu.matmul %17, %18, %cst_14 {dimension_numbers = #tpu.dot_dimension_numbers<[1], [0], [0], [1], [0, 0, 1, 1], [], []>} : vector<8x256xbf16>, vector<256x128xbf16>, vector<8x128xf32> -> vector<8x128xf32>
    %c0_15 = arith.constant 0 : index
    %c0_16 = arith.constant 0 : index
    %20 = vector.load %arg7[%c0_15, %c0_16] : memref<1x128xf32, #tpu.memory_space<vmem>>, vector<1x128xf32>
    %21 = vector.broadcast %20 : vector<1x128xf32> to vector<8x128xf32>
    %22 = arith.addf %19, %21 : vector<8x128xf32>
    %cst_17 = arith.constant 0.000000e+00 : f32
    %23 = vector.broadcast %cst_17 : f32 to vector<8x128xf32>
    %24 = arith.maximumf %22, %23 : vector<8x128xf32>
    %25 = arith.truncf %24 : vector<8x128xf32> to vector<8x128xbf16>
    %c0_18 = arith.constant 0 : index
    %c0_19 = arith.constant 0 : index
    %26 = vector.load %arg8[%c0_18, %c0_19] : memref<128x128xbf16, #tpu.memory_space<vmem>>, vector<128x128xbf16>
    %cst_20 = arith.constant dense<0.000000e+00> : vector<8x128xf32>
    %27 = tpu.matmul %25, %26, %cst_20 {dimension_numbers = #tpu.dot_dimension_numbers<[1], [0], [0], [1], [0, 0, 1, 1], [], []>} : vector<8x128xbf16>, vector<128x128xbf16>, vector<8x128xf32> -> vector<8x128xf32>
    %c0_21 = arith.constant 0 : index
    %c0_22 = arith.constant 0 : index
    %28 = vector.load %arg9[%c0_21, %c0_22] : memref<1x128xf32, #tpu.memory_space<vmem>>, vector<1x128xf32>
    %29 = vector.broadcast %28 : vector<1x128xf32> to vector<8x128xf32>
    %30 = arith.addf %27, %29 : vector<8x128xf32>
    %31 = arith.truncf %30 : vector<8x128xf32> to vector<8x128xbf16>
    %c0_23 = arith.constant 0 : index
    %c0_24 = arith.constant 0 : index
    %32 = vector.load %arg10[%c0_23, %c0_24] : memref<8x128xbf16, #tpu.memory_space<vmem>>, vector<8x128xbf16>
    tpu.vector_store %arg10[%c0_23, %c0_24], %31 {strides = array<i32>} : memref<8x128xbf16, #tpu.memory_space<vmem>>, vector<8x128xbf16>,
    return
  }
  func.func @transform_0(%arg0: i32) -> (i32, i32) {
    %c0_i32 = arith.constant 0 : i32
    %c0_i32_0 = arith.constant 0 : i32
    return %arg0, %c0_i32 : i32, i32
  }
  func.func @transform_1(%arg0: i32) -> (i32, i32) {
    %c0_i32 = arith.constant 0 : i32
    %c0_i32_0 = arith.constant 0 : i32
    %c0_i32_1 = arith.constant 0 : i32
    return %c0_i32, %c0_i32_0 : i32, i32
  }
  func.func @transform_2(%arg0: i32) -> (i32, i32) {
    %c0_i32 = arith.constant 0 : i32
    %c0_i32_0 = arith.constant 0 : i32
    %c0_i32_1 = arith.constant 0 : i32
    return %c0_i32, %c0_i32_0 : i32, i32
  }
  func.func @transform_3(%arg0: i32) -> (i32, i32) {
    %c0_i32 = arith.constant 0 : i32
    %c0_i32_0 = arith.constant 0 : i32
    %c0_i32_1 = arith.constant 0 : i32
    return %c0_i32, %c0_i32_0 : i32, i32
  }
  func.func @transform_4(%arg0: i32) -> (i32, i32) {
    %c0_i32 = arith.constant 0 : i32
    %c0_i32_0 = arith.constant 0 : i32
    %c0_i32_1 = arith.constant 0 : i32
    return %c0_i32, %c0_i32_0 : i32, i32
  }
  func.func @transform_5(%arg0: i32) -> (i32, i32) {
    %c0_i32 = arith.constant 0 : i32
    %c0_i32_0 = arith.constant 0 : i32
    %c0_i32_1 = arith.constant 0 : i32
    return %c0_i32, %c0_i32_0 : i32, i32
  }
  func.func @transform_6(%arg0: i32) -> (i32, i32) {
    %c0_i32 = arith.constant 0 : i32
    %c0_i32_0 = arith.constant 0 : i32
    %c0_i32_1 = arith.constant 0 : i32
    return %c0_i32, %c0_i32_0 : i32, i32
  }
  func.func @transform_7(%arg0: i32) -> (i32, i32) {
    %c0_i32 = arith.constant 0 : i32
    %c0_i32_0 = arith.constant 0 : i32
    %c0_i32_1 = arith.constant 0 : i32
    return %c0_i32, %c0_i32_0 : i32, i32
  }
  func.func @transform_8(%arg0: i32) -> (i32, i32) {
    %c0_i32 = arith.constant 0 : i32
    %c0_i32_0 = arith.constant 0 : i32
    %c0_i32_1 = arith.constant 0 : i32
    return %c0_i32, %c0_i32_0 : i32, i32
  }
  func.func @transform_9(%arg0: i32) -> (i32, i32) {
    %c0_i32 = arith.constant 0 : i32
    %c0_i32_0 = arith.constant 0 : i32
    return %arg0, %c0_i32 : i32, i32
  }
}

</mosaic_0001>

<llo_original>
// kernel: neural_net_forward.1
$region0: #{neural_net_forward.1}
  #allocation0 [shape = 'u32[]', space=smem, size = 0x4, offset = 0x4, fixed_abs, tag = 'smem constant byte address 0x4 - core index']
  #allocation1 [shape = 'u32[144,128]{1,0:T(1,128)}', space=vmem, size = 0x12000, scoped, tag = 'internal scratch']
  %s0 = inlined_call_operand.hbm [shape: f32[8,32], index: 0, kind: input, shape index: {}]
  %s1 = inlined_call_operand.hbm [shape: bf16[32,256], index: 1, kind: input, shape index: {}]
  %s2 = inlined_call_operand.vmem [shape: f32[1,256], index: 2, kind: input, shape index: {}]
  %s3 = inlined_call_operand.hbm [shape: bf16[256,256], index: 3, kind: input, shape index: {}]
  %s4 = inlined_call_operand.vmem [shape: f32[1,256], index: 4, kind: input, shape index: {}]
  %s5 = inlined_call_operand.hbm [shape: bf16[256,128], index: 5, kind: input, shape index: {}]
  %s6 = inlined_call_operand.vmem [shape: f32[1,128], index: 6, kind: input, shape index: {}]
  %s7 = inlined_call_operand.hbm [shape: bf16[128,128], index: 7, kind: input, shape index: {}]
  %s8 = inlined_call_operand.vmem [shape: f32[1,128], index: 8, kind: input, shape index: {}]
  %s9 = inlined_call_operand.vmem [shape: bf16[8,128], index: 9, kind: output, shape index: {}]
  %s10 = sld [smem:[#allocation0]]
  $region66: #{neural_net_forward.1} parent=0
    _
  %s12 = ssub.s32 1, %s10
  %s13 = scalar_select 0, %s12, %s10
  $region1: #{neural_net_forward.1} parent=0
    #allocation2 [shape = 'u8[4096]{0}', space=vmem, size = 0x1000, scoped, tag = 'input window, operand 0, single buffered']
    #allocation3 [shape = 's32[1]{0}', space=sflag, size = 0x4, scoped, tag = 'scoped memory for neural_net_forward.1']
    #allocation4 [shape = 'u8[16384]{0}', space=vmem, size = 0x4000, scoped, tag = 'input window, operand 1, single buffered']
    #allocation5 [shape = 's32[1]{0}', space=sflag, size = 0x4, scoped, tag = 'scoped memory for neural_net_forward.1']
    #allocation6 [shape = 'u8[131072]{0}', space=vmem, size = 0x20000, scoped, tag = 'input window, operand 3, single buffered']
    #allocation7 [shape = 'u8[65536]{0}', space=vmem, size = 0x10000, scoped, tag = 'input window, operand 5, single buffered']
    #allocation8 [shape = 's32[1]{0}', space=sflag, size = 0x4, scoped, tag = 'scoped memory for neural_net_forward.1']
    #allocation9 [shape = 'u8[32768]{0}', space=vmem, size = 0x8000, scoped, tag = 'input window, operand 7, single buffered']
    %14 = vsyncpa [#allocation3], 0
    %15 = vsyncpa [#allocation5], 0
    %16 = vsyncpa [#allocation8], 0
    // Predicated region
    $region2: #{neural_net_forward.1} parent=1 // pred_check
      _
    $region3: #{neural_net_forward.1} parent=1 // pred_check_branch
      %18 = sbr.rel (0) target = $region5
    $region4: #{neural_net_forward.1} parent=1 // pred_region
      %s20 = ssub.s32 128, 128
      %21 = vsyncadd [#allocation3], %s20
      %s23 = sshll.u32 [#allocation2], 4
      %s24 = int_to_ptr.vmem [resolvable:$true] %s23
      %26 = dma.hbm_to_vmem [thread:$0]  %s0, 128, %s24, [#allocation3]
    $region5: #{neural_net_forward.1} parent=1 // pred_fallthru
      _
    // Predicated region
    $region6: #{neural_net_forward.1} parent=1 // pred_check
      _
    $region7: #{neural_net_forward.1} parent=1 // pred_check_branch
      %28 = sbr.rel (0) target = $region9
    $region8: #{neural_net_forward.1} parent=1 // pred_region
      %s30 = ssub.s32 512, 512
      %31 = vsyncadd [#allocation5], %s30
      %s32 = sshll.u32 [#allocation4], 4
      %s33 = int_to_ptr.vmem [resolvable:$true] %s32
      %38 = dma.hbm_to_vmem [thread:$0]  %s1, 512, %s33, [#allocation5], 128, 128, 8
    $region9: #{neural_net_forward.1} parent=1 // pred_fallthru
      _
    // Predicated region
    $region10: #{neural_net_forward.1} parent=1 // pred_check
      _
    $region11: #{neural_net_forward.1} parent=1 // pred_check_branch
      %40 = sbr.rel (0) target = $region13
    $region12: #{neural_net_forward.1} parent=1 // pred_region
      _
    $region13: #{neural_net_forward.1} parent=1 // pred_fallthru
      _
    // Predicated region
    $region14: #{neural_net_forward.1} parent=1 // pred_check
      _
    $region15: #{neural_net_forward.1} parent=1 // pred_check_branch
      %42 = sbr.rel (0) target = $region17
    $region16: #{neural_net_forward.1} parent=1 // pred_region
      %s44 = ssub.s32 4096, 4096
      %45 = vsyncadd [#allocation5], %s44
      %s46 = sshll.u32 [#allocation6], 4
      %s47 = int_to_ptr.vmem [resolvable:$true] %s46
      %52 = dma.hbm_to_vmem [thread:$0]  %s3, 4096, %s47, [#allocation5], 128, 128, 8
    $region17: #{neural_net_forward.1} parent=1 // pred_fallthru
      _
    // Predicated region
    $region18: #{neural_net_forward.1} parent=1 // pred_check
      _
    $region19: #{neural_net_forward.1} parent=1 // pred_check_branch
      %54 = sbr.rel (0) target = $region21
    $region20: #{neural_net_forward.1} parent=1 // pred_region
      _
    $region21: #{neural_net_forward.1} parent=1 // pred_fallthru
      _
    // Predicated region
    $region22: #{neural_net_forward.1} parent=1 // pred_check
      _
    $region23: #{neural_net_forward.1} parent=1 // pred_check_branch
      %56 = sbr.rel (0) target = $region25
    $region24: #{neural_net_forward.1} parent=1 // pred_region
      %s58 = ssub.s32 2048, 2048
      %59 = vsyncadd [#allocation8], %s58
      %s60 = sshll.u32 [#allocation7], 4
      %s61 = int_to_ptr.vmem [resolvable:$true] %s60
      %66 = dma.hbm_to_vmem [thread:$0]  %s5, 2048, %s61, [#allocation8], 64, 64, 4
    $region25: #{neural_net_forward.1} parent=1 // pred_fallthru
      _
    // Predicated region
    $region26: #{neural_net_forward.1} parent=1 // pred_check
      _
    $region27: #{neural_net_forward.1} parent=1 // pred_check_branch
      %68 = sbr.rel (0) target = $region29
    $region28: #{neural_net_forward.1} parent=1 // pred_region
      _
    $region29: #{neural_net_forward.1} parent=1 // pred_fallthru
      _
    // Predicated region
    $region30: #{neural_net_forward.1} parent=1 // pred_check
      _
    $region31: #{neural_net_forward.1} parent=1 // pred_check_branch
      %70 = sbr.rel (0) target = $region33
    $region32: #{neural_net_forward.1} parent=1 // pred_region
      %s72 = ssub.s32 1024, 1024
      %73 = vsyncadd [#allocation8], %s72
      %s74 = sshll.u32 [#allocation9], 4
      %s75 = int_to_ptr.vmem [resolvable:$true] %s74
      %80 = dma.hbm_to_vmem [thread:$0]  %s7, 1024, %s75, [#allocation8], 64, 64, 4
    $region33: #{neural_net_forward.1} parent=1 // pred_fallthru
      _
    // Predicated region
    $region34: #{neural_net_forward.1} parent=1 // pred_check
      _
    $region35: #{neural_net_forward.1} parent=1 // pred_check_branch
      %82 = sbr.rel (0) target = $region37
    $region36: #{neural_net_forward.1} parent=1 // pred_region
      _
    $region37: #{neural_net_forward.1} parent=1 // pred_fallthru
      _
    // Predicated region
    $region38: #{neural_net_forward.1} parent=1 // pred_check
      _
    $region39: #{neural_net_forward.1} parent=1 // pred_check_branch
      %84 = sbr.rel (0) target = $region41
    $region40: #{neural_net_forward.1} parent=1 // pred_region
      %85 = dma.done [#allocation3], 128
    $region41: #{neural_net_forward.1} parent=1 // pred_fallthru
      _
    // Predicated region
    $region42: #{neural_net_forward.1} parent=1 // pred_check
      _
    $region43: #{neural_net_forward.1} parent=1 // pred_check_branch
      %87 = sbr.rel (0) target = $region45
    $region44: #{neural_net_forward.1} parent=1 // pred_region
      %88 = dma.done [#allocation5], 512
    $region45: #{neural_net_forward.1} parent=1 // pred_fallthru
      _
    // Predicated region
    $region46: #{neural_net_forward.1} parent=1 // pred_check
      _
    $region47: #{neural_net_forward.1} parent=1 // pred_check_branch
      %90 = sbr.rel (0) target = $region49
    $region48: #{neural_net_forward.1} parent=1 // pred_region
      %91 = dma.done [#allocation5], 4096
    $region49: #{neural_net_forward.1} parent=1 // pred_fallthru
      _
    // Predicated region
    $region50: #{neural_net_forward.1} parent=1 // pred_check
      _
    $region51: #{neural_net_forward.1} parent=1 // pred_check_branch
      %93 = sbr.rel (0) target = $region53
    $region52: #{neural_net_forward.1} parent=1 // pred_region
      %94 = dma.done [#allocation8], 2048
    $region53: #{neural_net_forward.1} parent=1 // pred_fallthru
      _
    // Predicated region
    $region54: #{neural_net_forward.1} parent=1 // pred_check
      _
    $region55: #{neural_net_forward.1} parent=1 // pred_check_branch
      %96 = sbr.rel (0) target = $region57
    $region56: #{neural_net_forward.1} parent=1 // pred_region
      %97 = dma.done [#allocation8], 1024
    $region57: #{neural_net_forward.1} parent=1 // pred_fallthru
      _
    %v99 = vld [vmem:[#allocation2] sm:$0xff]
    %v100 = vpack.c.bf16 %v99, %v99
    %v101 = vld [vmem:[#allocation4] sm:$0xff]
    %v102 = vld [vmem:[#allocation4 + $0x8] sm:$0xff]
    %v103 = vld [vmem:[#allocation4 + $0x10] sm:$0xff]
    %v104 = vld [vmem:[#allocation4 + $0x18] sm:$0xff]
    %v105 = vld [vmem:[%s2] sm:$0x3]
    %v107 = vlaneseq
    %v108 = vshrl.u32 %v107, 7
    %v109 = vsub.s32 0, %v108
    %v110 = vrot.slane %v105, %v109
    %v111 = vlaneseq
    %v112 = vshrl.u32 %v111, 7
    %v113 = vsub.s32 1, %v112
    %v114 = vrot.slane %v105, %v113
    %v121 = vunpack.c.l.b16 %v101
    %v122 = vunpack.c.h.b16 %v101
    %v123 = vunpack.c.l.b16 %v102
    %v124 = vunpack.c.h.b16 %v102
    %v125 = vunpack.c.l.b16 %v103
    %v126 = vunpack.c.h.b16 %v103
    %v127 = vunpack.c.l.b16 %v104
    %v128 = vunpack.c.h.b16 %v104
    %v129 = vpack.c.b16 %v123, %v121
    %v130 = vpack.c.b16 %v124, %v122
    %v131 = vpack.c.b16 %v127, %v125
    %v132 = vpack.c.b16 %v128, %v126
    %vm137 = vcmask 261120
    %v139 = vsel %vm137, %v100, 0
    %141 = vmatprep.subr.bf16.mxu0 0
    %142 = vmatpush1.bf16.msra.mxu0 0
    %143 = vmatprep.subr.bf16.mxu0 0
    %144 = vmatpush1.bf16.msra.mxu0 0
    %145 = vmatprep.subr.bf16.mxu0 0
    %146 = vmatpush1.bf16.msra.mxu0 0
    %147 = vmatprep.subr.bf16.mxu0 0
    %148 = vmatpush1.bf16.msra.mxu0 0
    %149 = vmatprep.subr.bf16.mxu0 0
    %150 = vmatpush1.bf16.msra.mxu0 0
    %151 = vmatprep.subr.bf16.mxu0 0
    %152 = vmatpush1.bf16.msra.mxu0 0
    %153 = vmatprep.subr.bf16.mxu0 %v132
    %154 = vmatpush1.bf16.msra.mxu0 %v131
    %155 = vmatprep.subr.bf16.mxu0 %v130
    %156 = vmatpush1.bf16.msra.mxu0 %v129
    %157 = vmatprep.subr.bf16.mxu0 0
    %158 = vmatpush2.bf16.msra.mxu0 0
    %159 = vmatprep.subr.bf16.mxu0 0
    %160 = vmatpush2.bf16.msra.mxu0 0
    %161 = vmatprep.subr.bf16.mxu0 0
    %162 = vmatpush2.bf16.msra.mxu0 0
    %163 = vmatprep.subr.bf16.mxu0 0
    %164 = vmatpush2.bf16.msra.mxu0 0
    %165 = vmatprep.subr.bf16.mxu0 0
    %166 = vmatpush2.bf16.msra.mxu0 0
    %167 = vmatprep.subr.bf16.mxu0 0
    %168 = vmatpush2.bf16.msra.mxu0 0
    %169 = vmatprep.subr.bf16.mxu0 0
    %170 = vmatpush2.bf16.msra.mxu0 0
    %171 = vmatprep.subr.bf16.mxu0 0
    %172 = vmatpush2.bf16.msra.mxu0 0
    %173 = vmatprep.mubr.bf16.mxu0 0
    %174 = vmatmul.mubr.bf16.gmra.mxu0 %v139
    %v175 = vpop.f32.mrf.mxu0
    %v176 = vadd.f32 %v110, %v175
    %v177 = vpop.f32.mrf.mxu0
    %v178 = vadd.f32 %v114, %v177
    %v179 = vpop.f32.mrf.mxu0
    %v180 = vpop.f32.mrf.mxu0
    %181 = vdwg.mxu0
    %v182 = vmax.f32 %v176, 0.0
    %v183 = vmax.f32 %v178, 0.0
    %v184 = vpack.c.bf16 %v182, %v182
    %v185 = vpack.c.bf16 %v183, %v183
    %v186 = vld [vmem:[#allocation6] sm:$0xff]
    %v187 = vld [vmem:[#allocation6 + $0x8] sm:$0xff]
    %v188 = vld [vmem:[#allocation6 + $0x10] sm:$0xff]
    %v189 = vld [vmem:[#allocation6 + $0x18] sm:$0xff]
    %v190 = vld [vmem:[#allocation6 + $0x20] sm:$0xff]
    %v191 = vld [vmem:[#allocation6 + $0x28] sm:$0xff]
    %v192 = vld [vmem:[#allocation6 + $0x30] sm:$0xff]
    %v193 = vld [vmem:[#allocation6 + $0x38] sm:$0xff]
    %v194 = vld [vmem:[#allocation6 + $0x40] sm:$0xff]
    %v195 = vld [vmem:[#allocation6 + $0x48] sm:$0xff]
    %v196 = vld [vmem:[#allocation6 + $0x50] sm:$0xff]
    %v197 = vld [vmem:[#allocation6 + $0x58] sm:$0xff]
    %v198 = vld [vmem:[#allocation6 + $0x60] sm:$0xff]
    %v199 = vld [vmem:[#allocation6 + $0x68] sm:$0xff]
    %v200 = vld [vmem:[#allocation6 + $0x70] sm:$0xff]
    %v201 = vld [vmem:[#allocation6 + $0x78] sm:$0xff]
    %v202 = vld [vmem:[#allocation6 + $0x80] sm:$0xff]
    %v203 = vld [vmem:[#allocation6 + $0x88] sm:$0xff]
    %v204 = vld [vmem:[#allocation6 + $0x90] sm:$0xff]
    %v205 = vld [vmem:[#allocation6 + $0x98] sm:$0xff]
    %v206 = vld [vmem:[#allocation6 + $0xa0] sm:$0xff]
    %v207 = vld [vmem:[#allocation6 + $0xa8] sm:$0xff]
    %v208 = vld [vmem:[#allocation6 + $0xb0] sm:$0xff]
    %v209 = vld [vmem:[#allocation6 + $0xb8] sm:$0xff]
    %v210 = vld [vmem:[#allocation6 + $0xc0] sm:$0xff]
    %v211 = vld [vmem:[#allocation6 + $0xc8] sm:$0xff]
    %v212 = vld [vmem:[#allocation6 + $0xd0] sm:$0xff]
    %v213 = vld [vmem:[#allocation6 + $0xd8] sm:$0xff]
    %v214 = vld [vmem:[#allocation6 + $0xe0] sm:$0xff]
    %v215 = vld [vmem:[#allocation6 + $0xe8] sm:$0xff]
    %v216 = vld [vmem:[#allocation6 + $0xf0] sm:$0xff]
    %v217 = vld [vmem:[#allocation6 + $0xf8] sm:$0xff]
    %v218 = vld [vmem:[%s4] sm:$0x3]
    %v220 = vlaneseq
    %v221 = vshrl.u32 %v220, 7
    %v222 = vsub.s32 0, %v221
    %v223 = vrot.slane %v218, %v222
    %v224 = vlaneseq
    %v225 = vshrl.u32 %v224, 7
    %v226 = vsub.s32 1, %v225
    %v227 = vrot.slane %v218, %v226
    %v262 = vunpack.c.l.b16 %v186
    %v263 = vunpack.c.h.b16 %v186
    %v264 = vunpack.c.l.b16 %v187
    %v265 = vunpack.c.h.b16 %v187
    %v266 = vunpack.c.l.b16 %v188
    %v267 = vunpack.c.h.b16 %v188
    %v268 = vunpack.c.l.b16 %v189
    %v269 = vunpack.c.h.b16 %v189
    %v270 = vunpack.c.l.b16 %v190
    %v271 = vunpack.c.h.b16 %v190
    %v272 = vunpack.c.l.b16 %v191
    %v273 = vunpack.c.h.b16 %v191
    %v274 = vunpack.c.l.b16 %v192
    %v275 = vunpack.c.h.b16 %v192
    %v276 = vunpack.c.l.b16 %v193
    %v277 = vunpack.c.h.b16 %v193
    %v278 = vunpack.c.l.b16 %v194
    %v279 = vunpack.c.h.b16 %v194
    %v280 = vunpack.c.l.b16 %v195
    %v281 = vunpack.c.h.b16 %v195
    %v282 = vunpack.c.l.b16 %v196
    %v283 = vunpack.c.h.b16 %v196
    %v284 = vunpack.c.l.b16 %v197
    %v285 = vunpack.c.h.b16 %v197
    %v286 = vunpack.c.l.b16 %v198
    %v287 = vunpack.c.h.b16 %v198
    %v288 = vunpack.c.l.b16 %v199
    %v289 = vunpack.c.h.b16 %v199
    %v290 = vunpack.c.l.b16 %v200
    %v291 = vunpack.c.h.b16 %v200
    %v292 = vunpack.c.l.b16 %v201
    %v293 = vunpack.c.h.b16 %v201
    %v294 = vunpack.c.l.b16 %v202
    %v295 = vunpack.c.h.b16 %v202
    %v296 = vunpack.c.l.b16 %v203
    %v297 = vunpack.c.h.b16 %v203
    %v298 = vunpack.c.l.b16 %v204
    %v299 = vunpack.c.h.b16 %v204
    %v300 = vunpack.c.l.b16 %v205
    %v301 = vunpack.c.h.b16 %v205
    %v302 = vunpack.c.l.b16 %v206
    %v303 = vunpack.c.h.b16 %v206
    %v304 = vunpack.c.l.b16 %v207
    %v305 = vunpack.c.h.b16 %v207
    %v306 = vunpack.c.l.b16 %v208
    %v307 = vunpack.c.h.b16 %v208
    %v308 = vunpack.c.l.b16 %v209
    %v309 = vunpack.c.h.b16 %v209
    %v310 = vunpack.c.l.b16 %v210
    %v311 = vunpack.c.h.b16 %v210
    %v312 = vunpack.c.l.b16 %v211
    %v313 = vunpack.c.h.b16 %v211
    %v314 = vunpack.c.l.b16 %v212
    %v315 = vunpack.c.h.b16 %v212
    %v316 = vunpack.c.l.b16 %v213
    %v317 = vunpack.c.h.b16 %v213
    %v318 = vunpack.c.l.b16 %v214
    %v319 = vunpack.c.h.b16 %v214
    %v320 = vunpack.c.l.b16 %v215
    %v321 = vunpack.c.h.b16 %v215
    %v322 = vunpack.c.l.b16 %v216
    %v323 = vunpack.c.h.b16 %v216
    %v324 = vunpack.c.l.b16 %v217
    %v325 = vunpack.c.h.b16 %v217
    %v326 = vpack.c.b16 %v264, %v262
    %v327 = vpack.c.b16 %v265, %v263
    %v328 = vpack.c.b16 %v268, %v266
    %v329 = vpack.c.b16 %v269, %v267
    %v330 = vpack.c.b16 %v272, %v270
    %v331 = vpack.c.b16 %v273, %v271
    %v332 = vpack.c.b16 %v276, %v274
    %v333 = vpack.c.b16 %v277, %v275
    %v334 = vpack.c.b16 %v280, %v278
    %v335 = vpack.c.b16 %v281, %v279
    %v336 = vpack.c.b16 %v284, %v282
    %v337 = vpack.c.b16 %v285, %v283
    %v338 = vpack.c.b16 %v288, %v286
    %v339 = vpack.c.b16 %v289, %v287
    %v340 = vpack.c.b16 %v292, %v290
    %v341 = vpack.c.b16 %v293, %v291
    %v342 = vpack.c.b16 %v296, %v294
    %v343 = vpack.c.b16 %v297, %v295
    %v344 = vpack.c.b16 %v300, %v298
    %v345 = vpack.c.b16 %v301, %v299
    %v346 = vpack.c.b16 %v304, %v302
    %v347 = vpack.c.b16 %v305, %v303
    %v348 = vpack.c.b16 %v308, %v306
    %v349 = vpack.c.b16 %v309, %v307
    %v350 = vpack.c.b16 %v312, %v310
    %v351 = vpack.c.b16 %v313, %v311
    %v352 = vpack.c.b16 %v316, %v314
    %v353 = vpack.c.b16 %v317, %v315
    %v354 = vpack.c.b16 %v320, %v318
    %v355 = vpack.c.b16 %v321, %v319
    %v356 = vpack.c.b16 %v324, %v322
    %v357 = vpack.c.b16 %v325, %v323
    %390 = vmatprep.subr.bf16.mxu0 %v341
    %391 = vmatpush1.bf16.msra.mxu0 %v340
    %392 = vmatprep.subr.bf16.mxu0 %v339
    %393 = vmatpush1.bf16.msra.mxu0 %v338
    %394 = vmatprep.subr.bf16.mxu0 %v337
    %395 = vmatpush1.bf16.msra.mxu0 %v336
    %396 = vmatprep.subr.bf16.mxu0 %v335
    %397 = vmatpush1.bf16.msra.mxu0 %v334
    %398 = vmatprep.subr.bf16.mxu0 %v333
    %399 = vmatpush1.bf16.msra.mxu0 %v332
    %400 = vmatprep.subr.bf16.mxu0 %v331
    %401 = vmatpush1.bf16.msra.mxu0 %v330
    %402 = vmatprep.subr.bf16.mxu0 %v329
    %403 = vmatpush1.bf16.msra.mxu0 %v328
    %404 = vmatprep.subr.bf16.mxu0 %v327
    %405 = vmatpush1.bf16.msra.mxu0 %v326
    %406 = vmatprep.subr.bf16.mxu0 %v357
    %407 = vmatpush2.bf16.msra.mxu0 %v356
    %408 = vmatprep.subr.bf16.mxu0 %v355
    %409 = vmatpush2.bf16.msra.mxu0 %v354
    %410 = vmatprep.subr.bf16.mxu0 %v353
    %411 = vmatpush2.bf16.msra.mxu0 %v352
    %412 = vmatprep.subr.bf16.mxu0 %v351
    %413 = vmatpush2.bf16.msra.mxu0 %v350
    %414 = vmatprep.subr.bf16.mxu0 %v349
    %415 = vmatpush2.bf16.msra.mxu0 %v348
    %416 = vmatprep.subr.bf16.mxu0 %v347
    %417 = vmatpush2.bf16.msra.mxu0 %v346
    %418 = vmatprep.subr.bf16.mxu0 %v345
    %419 = vmatpush2.bf16.msra.mxu0 %v344
    %420 = vmatprep.subr.bf16.mxu0 %v343
    %421 = vmatpush2.bf16.msra.mxu0 %v342
    %422 = vmatprep.mubr.bf16.mxu0 %v185
    %423 = vmatmul.mubr.bf16.gmra.mxu0 %v184
    %v424 = vpop.f32.mrf.mxu0
    %v425 = vadd.f32 %v223, %v424
    %v426 = vpop.f32.mrf.mxu0
    %v427 = vadd.f32 %v227, %v426
    %v428 = vpop.f32.mrf.mxu0
    %v429 = vpop.f32.mrf.mxu0
    %430 = vdwg.mxu0
    %v431 = vmax.f32 %v425, 0.0
    %v432 = vmax.f32 %v427, 0.0
    %v433 = vpack.c.bf16 %v431, %v431
    %v434 = vpack.c.bf16 %v432, %v432
    %v435 = vld [vmem:[#allocation7] sm:$0xf]
    %v436 = vld [vmem:[#allocation7 + $0x4] sm:$0xf]
    %v437 = vld [vmem:[#allocation7 + $0x8] sm:$0xf]
    %v438 = vld [vmem:[#allocation7 + $0xc] sm:$0xf]
    %v439 = vld [vmem:[#allocation7 + $0x10] sm:$0xf]
    %v440 = vld [vmem:[#allocation7 + $0x14] sm:$0xf]
    %v441 = vld [vmem:[#allocation7 + $0x18] sm:$0xf]
    %v442 = vld [vmem:[#allocation7 + $0x1c] sm:$0xf]
    %v443 = vld [vmem:[#allocation7 + $0x20] sm:$0xf]
    %v444 = vld [vmem:[#allocation7 + $0x24] sm:$0xf]
    %v445 = vld [vmem:[#allocation7 + $0x28] sm:$0xf]
    %v446 = vld [vmem:[#allocation7 + $0x2c] sm:$0xf]
    %v447 = vld [vmem:[#allocation7 + $0x30] sm:$0xf]
    %v448 = vld [vmem:[#allocation7 + $0x34] sm:$0xf]
    %v449 = vld [vmem:[#allocation7 + $0x38] sm:$0xf]
    %v450 = vld [vmem:[#allocation7 + $0x3c] sm:$0xf]
    %v451 = vld [vmem:[#allocation7 + $0x40] sm:$0xf]
    %v452 = vld [vmem:[#allocation7 + $0x44] sm:$0xf]
    %v453 = vld [vmem:[#allocation7 + $0x48] sm:$0xf]
    %v454 = vld [vmem:[#allocation7 + $0x4c] sm:$0xf]
    %v455 = vld [vmem:[#allocation7 + $0x50] sm:$0xf]
    %v456 = vld [vmem:[#allocation7 + $0x54] sm:$0xf]
    %v457 = vld [vmem:[#allocation7 + $0x58] sm:$0xf]
    %v458 = vld [vmem:[#allocation7 + $0x5c] sm:$0xf]
    %v459 = vld [vmem:[#allocation7 + $0x60] sm:$0xf]
    %v460 = vld [vmem:[#allocation7 + $0x64] sm:$0xf]
    %v461 = vld [vmem:[#allocation7 + $0x68] sm:$0xf]
    %v462 = vld [vmem:[#allocation7 + $0x6c] sm:$0xf]
    %v463 = vld [vmem:[#allocation7 + $0x70] sm:$0xf]
    %v464 = vld [vmem:[#allocation7 + $0x74] sm:$0xf]
    %v465 = vld [vmem:[#allocation7 + $0x78] sm:$0xf]
    %v466 = vld [vmem:[#allocation7 + $0x7c] sm:$0xf]
    %v467 = vld [vmem:[%s6] sm:$0x1]
    %v469 = vlaneseq
    %v470 = vshrl.u32 %v469, 7
    %v471 = vsub.s32 0, %v470
    %v472 = vrot.slane %v467, %v471
    %v506 = vunpack.c.l.b16 %v435
    %v507 = vunpack.c.l.b16 %v436
    %v508 = vunpack.c.l.b16 %v437
    %v509 = vunpack.c.l.b16 %v438
    %v510 = vunpack.c.l.b16 %v439
    %v511 = vunpack.c.l.b16 %v440
    %v512 = vunpack.c.l.b16 %v441
    %v513 = vunpack.c.l.b16 %v442
    %v514 = vunpack.c.l.b16 %v443
    %v515 = vunpack.c.l.b16 %v444
    %v516 = vunpack.c.l.b16 %v445
    %v517 = vunpack.c.l.b16 %v446
    %v518 = vunpack.c.l.b16 %v447
    %v519 = vunpack.c.l.b16 %v448
    %v520 = vunpack.c.l.b16 %v449
    %v521 = vunpack.c.l.b16 %v450
    %v522 = vunpack.c.l.b16 %v451
    %v523 = vunpack.c.l.b16 %v452
    %v524 = vunpack.c.l.b16 %v453
    %v525 = vunpack.c.l.b16 %v454
    %v526 = vunpack.c.l.b16 %v455
    %v527 = vunpack.c.l.b16 %v456
    %v528 = vunpack.c.l.b16 %v457
    %v529 = vunpack.c.l.b16 %v458
    %v530 = vunpack.c.l.b16 %v459
    %v531 = vunpack.c.l.b16 %v460
    %v532 = vunpack.c.l.b16 %v461
    %v533 = vunpack.c.l.b16 %v462
    %v534 = vunpack.c.l.b16 %v463
    %v535 = vunpack.c.l.b16 %v464
    %v536 = vunpack.c.l.b16 %v465
    %v537 = vunpack.c.l.b16 %v466
    %v538 = vpack.c.b16 %v507, %v506
    %v539 = vpack.c.b16 %v509, %v508
    %v540 = vpack.c.b16 %v511, %v510
    %v541 = vpack.c.b16 %v513, %v512
    %v542 = vpack.c.b16 %v515, %v514
    %v543 = vpack.c.b16 %v517, %v516
    %v544 = vpack.c.b16 %v519, %v518
    %v545 = vpack.c.b16 %v521, %v520
    %v546 = vpack.c.b16 %v523, %v522
    %v547 = vpack.c.b16 %v525, %v524
    %v548 = vpack.c.b16 %v527, %v526
    %v549 = vpack.c.b16 %v529, %v528
    %v550 = vpack.c.b16 %v531, %v530
    %v551 = vpack.c.b16 %v533, %v532
    %v552 = vpack.c.b16 %v535, %v534
    %v553 = vpack.c.b16 %v537, %v536
    %570 = vmatprep.subr.bf16.mxu0 0
    %571 = vmatpush1.bf16.msra.mxu0 %v545
    %572 = vmatprep.subr.bf16.mxu0 0
    %573 = vmatpush1.bf16.msra.mxu0 %v544
    %574 = vmatprep.subr.bf16.mxu0 0
    %575 = vmatpush1.bf16.msra.mxu0 %v543
    %576 = vmatprep.subr.bf16.mxu0 0
    %577 = vmatpush1.bf16.msra.mxu0 %v542
    %578 = vmatprep.subr.bf16.mxu0 0
    %579 = vmatpush1.bf16.msra.mxu0 %v541
    %580 = vmatprep.subr.bf16.mxu0 0
    %581 = vmatpush1.bf16.msra.mxu0 %v540
    %582 = vmatprep.subr.bf16.mxu0 0
    %583 = vmatpush1.bf16.msra.mxu0 %v539
    %584 = vmatprep.subr.bf16.mxu0 0
    %585 = vmatpush1.bf16.msra.mxu0 %v538
    %586 = vmatprep.subr.bf16.mxu0 0
    %587 = vmatpush2.bf16.msra.mxu0 %v553
    %588 = vmatprep.subr.bf16.mxu0 0
    %589 = vmatpush2.bf16.msra.mxu0 %v552
    %590 = vmatprep.subr.bf16.mxu0 0
    %591 = vmatpush2.bf16.msra.mxu0 %v551
    %592 = vmatprep.subr.bf16.mxu0 0
    %593 = vmatpush2.bf16.msra.mxu0 %v550
    %594 = vmatprep.subr.bf16.mxu0 0
    %595 = vmatpush2.bf16.msra.mxu0 %v549
    %596 = vmatprep.subr.bf16.mxu0 0
    %597 = vmatpush2.bf16.msra.mxu0 %v548
    %598 = vmatprep.subr.bf16.mxu0 0
    %599 = vmatpush2.bf16.msra.mxu0 %v547
    %600 = vmatprep.subr.bf16.mxu0 0
    %601 = vmatpush2.bf16.msra.mxu0 %v546
    %602 = vmatprep.mubr.bf16.mxu0 %v434
    %603 = vmatmul.mubr.bf16.gmra.mxu0 %v433
    %v604 = vpop.f32.mrf.mxu0
    %v605 = vadd.f32 %v472, %v604
    %v606 = vpop.f32.mrf.mxu0
    %v607 = vpop.f32.mrf.mxu0
    %v608 = vpop.f32.mrf.mxu0
    %609 = vdwg.mxu0
    %v610 = vmax.f32 %v605, 0.0
    %v611 = vpack.c.bf16 %v610, %v610
    %v612 = vld [vmem:[#allocation9] sm:$0xf]
    %v613 = vld [vmem:[#allocation9 + $0x4] sm:$0xf]
    %v614 = vld [vmem:[#allocation9 + $0x8] sm:$0xf]
    %v615 = vld [vmem:[#allocation9 + $0xc] sm:$0xf]
    %v616 = vld [vmem:[#allocation9 + $0x10] sm:$0xf]
    %v617 = vld [vmem:[#allocation9 + $0x14] sm:$0xf]
    %v618 = vld [vmem:[#allocation9 + $0x18] sm:$0xf]
    %v619 = vld [vmem:[#allocation9 + $0x1c] sm:$0xf]
    %v620 = vld [vmem:[#allocation9 + $0x20] sm:$0xf]
    %v621 = vld [vmem:[#allocation9 + $0x24] sm:$0xf]
    %v622 = vld [vmem:[#allocation9 + $0x28] sm:$0xf]
    %v623 = vld [vmem:[#allocation9 + $0x2c] sm:$0xf]
    %v624 = vld [vmem:[#allocation9 + $0x30] sm:$0xf]
    %v625 = vld [vmem:[#allocation9 + $0x34] sm:$0xf]
    %v626 = vld [vmem:[#allocation9 + $0x38] sm:$0xf]
    %v627 = vld [vmem:[#allocation9 + $0x3c] sm:$0xf]
    %v628 = vld [vmem:[%s8] sm:$0x1]
    %v630 = vlaneseq
    %v631 = vshrl.u32 %v630, 7
    %v632 = vsub.s32 0, %v631
    %v633 = vrot.slane %v628, %v632
    %v651 = vunpack.c.l.b16 %v612
    %v652 = vunpack.c.l.b16 %v613
    %v653 = vunpack.c.l.b16 %v614
    %v654 = vunpack.c.l.b16 %v615
    %v655 = vunpack.c.l.b16 %v616
    %v656 = vunpack.c.l.b16 %v617
    %v657 = vunpack.c.l.b16 %v618
    %v658 = vunpack.c.l.b16 %v619
    %v659 = vunpack.c.l.b16 %v620
    %v660 = vunpack.c.l.b16 %v621
    %v661 = vunpack.c.l.b16 %v622
    %v662 = vunpack.c.l.b16 %v623
    %v663 = vunpack.c.l.b16 %v624
    %v664 = vunpack.c.l.b16 %v625
    %v665 = vunpack.c.l.b16 %v626
    %v666 = vunpack.c.l.b16 %v627
    %v667 = vpack.c.b16 %v652, %v651
    %v668 = vpack.c.b16 %v654, %v653
    %v669 = vpack.c.b16 %v656, %v655
    %v670 = vpack.c.b16 %v658, %v657
    %v671 = vpack.c.b16 %v660, %v659
    %v672 = vpack.c.b16 %v662, %v661
    %v673 = vpack.c.b16 %v664, %v663
    %v674 = vpack.c.b16 %v666, %v665
    %683 = vmatprep.subr.bf16.mxu0 0
    %684 = vmatpush1.bf16.msra.mxu0 %v674
    %685 = vmatprep.subr.bf16.mxu0 0
    %686 = vmatpush1.bf16.msra.mxu0 %v673
    %687 = vmatprep.subr.bf16.mxu0 0
    %688 = vmatpush1.bf16.msra.mxu0 %v672
    %689 = vmatprep.subr.bf16.mxu0 0
    %690 = vmatpush1.bf16.msra.mxu0 %v671
    %691 = vmatprep.subr.bf16.mxu0 0
    %692 = vmatpush1.bf16.msra.mxu0 %v670
    %693 = vmatprep.subr.bf16.mxu0 0
    %694 = vmatpush1.bf16.msra.mxu0 %v669
    %695 = vmatprep.subr.bf16.mxu0 0
    %696 = vmatpush1.bf16.msra.mxu0 %v668
    %697 = vmatprep.subr.bf16.mxu0 0
    %698 = vmatpush1.bf16.msra.mxu0 %v667
    %699 = vmatprep.subr.bf16.mxu0 0
    %700 = vmatpush2.bf16.msra.mxu0 0
    %701 = vmatprep.subr.bf16.mxu0 0
    %702 = vmatpush2.bf16.msra.mxu0 0
    %703 = vmatprep.subr.bf16.mxu0 0
    %704 = vmatpush2.bf16.msra.mxu0 0
    %705 = vmatprep.subr.bf16.mxu0 0
    %706 = vmatpush2.bf16.msra.mxu0 0
    %707 = vmatprep.subr.bf16.mxu0 0
    %708 = vmatpush2.bf16.msra.mxu0 0
    %709 = vmatprep.subr.bf16.mxu0 0
    %710 = vmatpush2.bf16.msra.mxu0 0
    %711 = vmatprep.subr.bf16.mxu0 0
    %712 = vmatpush2.bf16.msra.mxu0 0
    %713 = vmatprep.subr.bf16.mxu0 0
    %714 = vmatpush2.bf16.msra.mxu0 0
    %715 = vmatprep.mubr.bf16.mxu0 0
    %716 = vmatmul.mubr.bf16.gmra.mxu0 %v611
    %v717 = vpop.f32.mrf.mxu0
    %v718 = vadd.f32 %v633, %v717
    %v719 = vpop.f32.mrf.mxu0
    %v720 = vpop.f32.mrf.mxu0
    %v721 = vpop.f32.mrf.mxu0
    %722 = vdwg.mxu0
    %v723 = vpack.c.bf16 %v718, %v718
    %724 = vst [vmem:[%s9] sm:$0xf] %v723
    // Predicated region
    $region58: #{neural_net_forward.1} parent=1 // pred_check
      _
    $region59: #{neural_net_forward.1} parent=1 // pred_check_branch
      %726 = sbr.rel (0) target = $region61
    $region60: #{neural_net_forward.1} parent=1 // pred_region
      _
    $region61: #{neural_net_forward.1} parent=1 // pred_fallthru
      _
    // Predicated region
    $region62: #{neural_net_forward.1} parent=1 // pred_check
      _
    $region63: #{neural_net_forward.1} parent=1 // pred_check_branch
      %728 = sbr.rel (0) target = $region65
    $region64: #{neural_net_forward.1} parent=1 // pred_region
      _
    $region65: #{neural_net_forward.1} parent=1 // pred_fallthru
      _
    %729 = vsyncpa [#allocation3], 1
    %730 = vsyncpa [#allocation5], 1
    %731 = vsyncpa [#allocation8], 1

</llo_original>
